<compile_context>
chip_gen: v7x
topology: tpu7x:2x2x1
jax: 0.10.0
libtpu: 0.0.40
codegen_flags: <defaults>
</compile_context>

<pallas_src>
import functools

import jax
import jax.numpy as jnp
import numpy as np
from jax.experimental import pallas as pl
from jax.experimental.pallas import tpu as pltpu


def _round_up(x, m):
    return ((x + m - 1) // m) * m


# ---------------------------------------------------------------------------
# Fused kernel: sigmoid + mean-over-frames (lane-dense) and box post-processing
# ---------------------------------------------------------------------------
def _fused_kernel(scale_ref, logits_ref, boxes_ref, traj_ref, box_ref, *, v):
    # scale_ref  : (1, Lbox) f32    [img_w, img_h, img_w, img_h, ..., 0-pad]
    # logits_ref : (F, Lcls) float  [T*C real lanes, large-negative pad]
    # boxes_ref  : (F, Lbox) float  [cx, cy, w, h per trajectory, 0-pad]
    # traj_ref   : (1, Lcls) f32    mean over the first v frames of sigmoid
    # box_ref    : (v, Lbox) f32    xyxy pixel boxes, clamped to the image

    # --- classification: sigmoid on the first v frames + mean over frames ---
    sig = jax.nn.sigmoid(logits_ref[0:v, :].astype(jnp.float32))      # (v, Lcls)
    traj_ref[...] = jnp.sum(sig, axis=0, keepdims=True) * (1.0 / v)

    # --- boxes: cxcywh -> xyxy (roll + lane-mask select), scale, clamp ------
    b = boxes_ref[...].astype(jnp.float32)                            # (F, Lbox)
    lbox = b.shape[-1]
    b_fwd = pltpu.roll(b, shift=lbox - 2, axis=1)   # value at lane i+2 (w, h)
    b_bwd = pltpu.roll(b, shift=2, axis=1)          # value at lane i-2 (cx, cy)
    lane = jax.lax.broadcasted_iota(jnp.int32, (1, lbox), 1)
    is_xy = (lane % 4) < 2                          # lanes holding cx / cy
    xyxy = jnp.where(is_xy, b - 0.5 * b_fwd, b_bwd + 0.5 * b)
    scale = scale_ref[...]                          # (1, Lbox) broadcast
    box_ref[...] = jnp.clip(xyxy * scale, 0.0, scale)[0:v, :]


def _fused_postprocess(scale_vec, logits_pad, boxes_pad, v):
    _, lcls = logits_pad.shape
    _, lbox = boxes_pad.shape
    kernel = functools.partial(_fused_kernel, v=v)
    return pl.pallas_call(
        kernel,
        out_shape=(
            jax.ShapeDtypeStruct((1, lcls), jnp.float32),   # trajectory probs
            jax.ShapeDtypeStruct((v, lbox), jnp.float32),   # xyxy pixel boxes
        ),
        in_specs=[
            pl.BlockSpec(memory_space=pltpu.MemorySpace.VMEM),  # scale row
            pl.BlockSpec(memory_space=pltpu.MemorySpace.VMEM),  # logits
            pl.BlockSpec(memory_space=pltpu.MemorySpace.VMEM),  # boxes
        ],
        out_specs=(
            pl.BlockSpec(memory_space=pltpu.MemorySpace.VMEM),
            pl.BlockSpec(memory_space=pltpu.MemorySpace.VMEM),
        ),
    )(scale_vec, logits_pad, boxes_pad)


# ---------------------------------------------------------------------------
# Jitted forward glue: padding, kernel launch, top-k, index decode, gathers.
# ---------------------------------------------------------------------------
@functools.partial(
    jax.jit, static_argnames=("v", "num_out", "num_frames", "process_boxes")
)
def _devis_forward(pred_logits, pred_boxes, scale_vec, *, v, num_out,
                   num_frames, process_boxes):
    c = pred_logits.shape[-1]
    f = num_frames
    t = pred_boxes.shape[1] // f
    lcls = _round_up(t * c, 128)
    lbox = scale_vec.shape[-1]

    # Free contiguous reshapes to lane-dense-able 2-D layouts.
    logits_2d = pred_logits.reshape(f, t * c)
    boxes_2d = pred_boxes.reshape(f, t * 4)

    # Pad trailing dims to multiples of 128 (unmasked stores inside kernel).
    logits_pad = jnp.pad(logits_2d, ((0, 0), (0, lcls - t * c)),
                         constant_values=-1e4)      # sigmoid(pad) ~ 0
    boxes_pad = jnp.pad(boxes_2d, ((0, 0), (0, lbox - t * 4)))

    traj, box_xyxy = _fused_postprocess(scale_vec, logits_pad, boxes_pad, v)

    # top-k over the real T*C trajectory scores (padded lanes excluded).
    _, top_k_idx = jax.lax.top_k(traj[0, : t * c], num_out)
    query_top_k_indexes = top_k_idx // c
    labels = top_k_idx % c

    # Scores: sigmoid recomputed only on the K gathered columns (no full
    # sigmoid tensor ever written back to HBM).
    pred_scores = jax.nn.sigmoid(
        logits_2d[:v, :].astype(jnp.float32)[:, top_k_idx])            # (v, K)
    pred_classes = jnp.tile(labels[None, :], (v, 1)) + 1               # (v, K)
    pred_ct_points = (
        pred_boxes.reshape(f, t, 4)[:v, :, :2][:, query_top_k_indexes])  # (v,K,2)

    results = {
        "scores": pred_scores,
        "labels": pred_classes,
        "center_points": pred_ct_points,
    }
    if process_boxes:
        results["boxes"] = (
            box_xyxy[:, : t * 4].reshape(v, t, 4)[:, query_top_k_indexes])
    return query_top_k_indexes, results


# ---------------------------------------------------------------------------
# Module wrapper.
# ---------------------------------------------------------------------------
class DeVISPostProcessorPallas:
    def __init__(self, focal_loss, num_out, use_top_k, num_frames):
        assert focal_loss, "only the focal_loss branch is implemented (as in forward)"
        self.focal_loss = focal_loss
        self.num_out = num_out
        self.use_top_k = use_top_k
        self.num_frames = num_frames

    def __call__(self, outputs, tgt_size, video_length, process_boxes=True):
        pred_logits = outputs["pred_logits"]   # (1, F*T, C), any float dtype
        pred_boxes = outputs["pred_boxes"]     # (1, F*T, 4)
        f = self.num_frames
        t = pred_boxes.shape[1] // f
        # video_length sizes the outputs (static), clamp to [1, F] like the
        # torch [:video_length] slice cap; callers must not pass 0.
        v = max(1, min(int(video_length), f))

        # Host-side [w, h, w, h, ...] scale row, zero-padded to the lane-dense
        # box width.  Passed as data, so image-size changes never recompile.
        img_h, img_w = float(tgt_size[0]), float(tgt_size[1])
        lbox = _round_up(t * 4, 128)
        scale_np = np.zeros((1, lbox), np.float32)
        scale_np[0, : t * 4] = np.tile(
            np.array([img_w, img_h, img_w, img_h], np.float32), t)
        scale_vec = jnp.asarray(scale_np)

        return _devis_forward(
            pred_logits, pred_boxes, scale_vec,
            v=v, num_out=self.num_out, num_frames=f,
            process_boxes=bool(process_boxes))


# ---------------------------------------------------------------------------
# Pure-JAX reference (correctness check of the fused kernel + glue).
# ---------------------------------------------------------------------------
def _reference(pred_logits, pred_boxes, tgt_size, V, F, num_out):
    C = pred_logits.shape[-1]
    T = pred_boxes.shape[1] // F
    sig = jax.nn.sigmoid(pred_logits.astype(jnp.float32)).reshape(F, T, C)
    traj = sig[:V].mean(0).reshape(-1)
    _, idx = jax.lax.top_k(traj, num_out)
    q = idx // C
    lab = idx % C
    scores = sig[:, q, lab][:V]
    b = pred_boxes[0].astype(jnp.float32)
    xy, wh = b[:, :2], b[:, 2:]
    xyxy = jnp.concatenate([xy - 0.5 * wh, xy + 0.5 * wh], axis=-1)
    h, w = float(tgt_size[0]), float(tgt_size[1])
    s = jnp.array([w, h, w, h], dtype=jnp.float32)
    bb = jnp.clip(xyxy * s, 0.0, s).reshape(F, T, 4)[:, q][:V]
    cp = pred_boxes[0, :, :2].reshape(F, T, 2)[:, q][:V]
    return q, scores, bb, cp, lab


if __name__ == "__main__":
    # Small shapes consistent with the module: 8 frames, 6 trajectories/frame,
    # 16 classes, video of 6 valid frames, keep top 5 predictions.
    F, T, C = 8, 6, 16
    video_length = 6
    num_out = 5
    tgt_size = (480.0, 640.0)  # (img_h, img_w)

    key = jax.random.PRNGKey(0)
    k1, k2 = jax.random.split(key)
    pred_logits = jax.random.normal(k1, (1, F * T, C), dtype=jnp.float32)
    pred_boxes = jax.random.uniform(
        k2, (1, F * T, 4), dtype=jnp.float32, minval=0.1, maxval=0.9
    )
    outputs = {"pred_logits": pred_logits, "pred_boxes": pred_boxes}

    post = DeVISPostProcessorPallas(
        focal_loss=True, num_out=num_out, use_top_k=True, num_frames=F
    )
    q_idx, results = post(outputs, tgt_size, video_length, process_boxes=True)
    jax.block_until_ready((q_idx, results))

    # Verify against a pure-JAX reference of the same forward pass.
    q_ref, scores_ref, boxes_ref, cp_ref, lab_ref = _reference(
        pred_logits, pred_boxes, tgt_size, video_length, F, num_out
    )
    np.testing.assert_array_equal(np.asarray(q_idx), np.asarray(q_ref))
    np.testing.assert_allclose(
        np.asarray(results["scores"]), np.asarray(scores_ref), rtol=1e-5, atol=1e-5
    )
    np.testing.assert_allclose(
        np.asarray(results["boxes"]), np.asarray(boxes_ref), rtol=1e-5, atol=1e-4
    )
    np.testing.assert_allclose(
        np.asarray(results["center_points"]), np.asarray(cp_ref), rtol=1e-6, atol=1e-6
    )
    np.testing.assert_array_equal(
        np.asarray(results["labels"]),
        np.asarray(lab_ref)[None, :].repeat(video_length, 0) + 1,
    )
    assert results["scores"].shape == (video_length, num_out)
    assert results["labels"].shape == (video_length, num_out)
    assert results["center_points"].shape == (video_length, num_out, 2)
    assert results["boxes"].shape == (video_length, num_out, 4)

    print("KERNEL_OK")
</pallas_src>

<mosaic_0001>
module attributes {stable_mosaic.version = 11 : i64} {
  func.func @_fused_kernel(%arg0: memref<1x128xf32, #tpu.memory_space<vmem>>, %arg1: memref<8x128xf32, #tpu.memory_space<vmem>>, %arg2: memref<8x128xf32, #tpu.memory_space<vmem>>, %arg3: memref<1x128xf32, #tpu.memory_space<vmem>>, %arg4: memref<6x128xf32, #tpu.memory_space<vmem>>) attributes {dimension_semantics = [], scalar_prefetch = 0 : i64, scratch_operands = 0 : i64, tpu.core_type = #tpu.core_type<tc>} {
    %c0 = arith.constant 0 : index
    %c0_0 = arith.constant 0 : index
    %0 = vector.load %arg1[%c0, %c0_0] : memref<8x128xf32, #tpu.memory_space<vmem>>, vector<6x128xf32>
    %1 = arith.negf %0 : vector<6x128xf32>
    %2 = math.exp %1 : vector<6x128xf32>
    %cst = arith.constant 1.000000e+00 : f32
    %3 = vector.broadcast %cst : f32 to vector<6x128xf32>
    %4 = arith.addf %3, %2 : vector<6x128xf32>
    %5 = arith.divf %3, %4 : vector<6x128xf32>
    %cst_1 = arith.constant dense<0.000000e+00> : vector<128xf32>
    %6 = vector.multi_reduction <add>, %5, %cst_1 [0] : vector<6x128xf32> to vector<128xf32>
    %7 = vector.shape_cast %6 : vector<128xf32> to vector<1x128xf32>
    %cst_2 = arith.constant 0.166666672 : f32
    %8 = vector.broadcast %cst_2 : f32 to vector<1x128xf32>
    %9 = arith.mulf %7, %8 : vector<1x128xf32>
    %c0_3 = arith.constant 0 : index
    %c0_4 = arith.constant 0 : index
    %10 = vector.load %arg3[%c0_3, %c0_4] : memref<1x128xf32, #tpu.memory_space<vmem>>, vector<1x128xf32>
    tpu.vector_store %arg3[%c0_3, %c0_4], %9 {strides = array<i32>} : memref<1x128xf32, #tpu.memory_space<vmem>>, vector<1x128xf32>,
    %c0_5 = arith.constant 0 : index
    %c0_6 = arith.constant 0 : index
    %11 = vector.load %arg2[%c0_5, %c0_6] : memref<8x128xf32, #tpu.memory_space<vmem>>, vector<8x128xf32>
    %c126_i32 = arith.constant 126 : i32
    %12 = tpu.dynamic_rotate %11 by %c126_i32 dim 1 : vector<8x128xf32>, i32 -> vector<8x128xf32>
    %c2_i32 = arith.constant 2 : i32
    %13 = tpu.dynamic_rotate %11 by %c2_i32 dim 1 : vector<8x128xf32>, i32 -> vector<8x128xf32>
    %14 = tpu.iota {dimensions = array<i32: 1>} : vector<1x128xi32>
    %c4_i32 = arith.constant 4 : i32
    %c0_i32 = arith.constant 0 : i32
    %15 = arith.cmpi eq, %c4_i32, %c0_i32 : i32
    %c1_i32 = arith.constant 1 : i32
    %16 = arith.select %15, %c1_i32, %c4_i32 : i32
    %17 = vector.broadcast %16 : i32 to vector<1x128xi32>
    %18 = arith.remsi %14, %17 : vector<1x128xi32>
    %c0_i32_7 = arith.constant 0 : i32
    %19 = vector.broadcast %c0_i32_7 : i32 to vector<1x128xi32>
    %20 = arith.cmpi ne, %18, %19 : vector<1x128xi32>
    %c0_i32_8 = arith.constant 0 : i32
    %21 = vector.broadcast %c0_i32_8 : i32 to vector<1x128xi32>
    %22 = arith.cmpi slt, %18, %21 : vector<1x128xi32>
    %c0_i32_9 = arith.constant 0 : i32
    %23 = arith.cmpi slt, %16, %c0_i32_9 : i32
    %24 = vector.broadcast %23 : i1 to vector<1x128xi1>
    %25 = vector.broadcast %24 : vector<1x128xi1> to vector<1x128xi1>
    %26 = arith.xori %22, %25 : vector<1x128xi1>
    %27 = arith.andi %26, %20 : vector<1x128xi1>
    %28 = vector.broadcast %16 : i32 to vector<1x128xi32>
    %29 = arith.addi %18, %28 : vector<1x128xi32>
    %30 = arith.select %27, %29, %18 : vector<1x128xi1>, vector<1x128xi32>
    %c2_i32_10 = arith.constant 2 : i32
    %31 = vector.broadcast %c2_i32_10 : i32 to vector<1x128xi32>
    %32 = arith.cmpi slt, %30, %31 : vector<1x128xi32>
    %cst_11 = arith.constant 5.000000e-01 : f32
    %33 = vector.broadcast %cst_11 : f32 to vector<8x128xf32>
    %34 = arith.mulf %33, %12 : vector<8x128xf32>
    %35 = arith.subf %11, %34 : vector<8x128xf32>
    %cst_12 = arith.constant 5.000000e-01 : f32
    %36 = vector.broadcast %cst_12 : f32 to vector<8x128xf32>
    %37 = arith.mulf %36, %11 : vector<8x128xf32>
    %38 = arith.addf %13, %37 : vector<8x128xf32>
    %39 = vector.shape_cast %32 : vector<1x128xi1> to vector<1x128xi1>
    %40 = vector.broadcast %39 : vector<1x128xi1> to vector<8x128xi1>
    %41 = arith.select %40, %35, %38 : vector<8x128xi1>, vector<8x128xf32>
    %c0_13 = arith.constant 0 : index
    %c0_14 = arith.constant 0 : index
    %42 = vector.load %arg0[%c0_13, %c0_14] : memref<1x128xf32, #tpu.memory_space<vmem>>, vector<1x128xf32>
    %43 = vector.broadcast %42 : vector<1x128xf32> to vector<8x128xf32>
    %44 = arith.mulf %41, %43 : vector<8x128xf32>
    %cst_15 = arith.constant 0.000000e+00 : f32
    %45 = vector.broadcast %cst_15 : f32 to vector<8x128xf32>
    %46 = arith.maximumf %45, %44 : vector<8x128xf32>
    %47 = vector.broadcast %42 : vector<1x128xf32> to vector<8x128xf32>
    %48 = arith.minimumf %47, %46 : vector<8x128xf32>
    %49 = vector.extract_strided_slice %48 {offsets = [0, 0], sizes = [6, 128], strides = [1, 1]} : vector<8x128xf32> to vector<6x128xf32>
    %c0_16 = arith.constant 0 : index
    %c0_17 = arith.constant 0 : index
    %50 = vector.load %arg4[%c0_16, %c0_17] : memref<6x128xf32, #tpu.memory_space<vmem>>, vector<6x128xf32>
    tpu.vector_store %arg4[%c0_16, %c0_17], %49 {strides = array<i32>} : memref<6x128xf32, #tpu.memory_space<vmem>>, vector<6x128xf32>,
    return
  }
}

</mosaic_0001>

<llo_original>
// kernel: _devis_forward.1
$region0: #{_devis_forward.1}
  #allocation0 [shape = 'u32[]', space=smem, size = 0x4, offset = 0x4, fixed_abs, tag = 'smem constant byte address 0x4 - core index']
  #allocation1 [shape = 'u32[144,128]{1,0:T(1,128)}', space=vmem, size = 0x12000, scoped, tag = 'internal scratch']
  %s0 = inlined_call_operand.vmem [shape: f32[1,128], index: 0, kind: input, shape index: {}]
  %s1 = inlined_call_operand.vmem [shape: f32[8,128], index: 1, kind: input, shape index: {}]
  %s2 = inlined_call_operand.vmem [shape: f32[8,128], index: 2, kind: input, shape index: {}]
  %s3 = inlined_call_operand.vmem [shape: f32[1,128], index: 3, kind: output, shape index: {0}]
  %s4 = inlined_call_operand.vmem [shape: f32[6,128], index: 4, kind: output, shape index: {1}]
  %5 = xla_tuple %s3, %s4
  %s6 = sld [smem:[#allocation0]]
  $region30: #{_devis_forward.1} parent=0
    _
  %s8 = ssub.s32 1, %s6
  %s9 = scalar_select 0, %s8, %s6
  // Predicated region
  $region2: #{_devis_forward.1} parent=0 // pred_check
    _
  $region3: #{_devis_forward.1} parent=0 // pred_check_branch
    %11 = sbr.rel (0) target = $region5
  $region4: #{_devis_forward.1} parent=0 // pred_region
    _
  $region5: #{_devis_forward.1} parent=0 // pred_fallthru
    _
  // Predicated region
  $region6: #{_devis_forward.1} parent=0 // pred_check
    _
  $region7: #{_devis_forward.1} parent=0 // pred_check_branch
    %13 = sbr.rel (0) target = $region9
  $region8: #{_devis_forward.1} parent=0 // pred_region
    _
  $region9: #{_devis_forward.1} parent=0 // pred_fallthru
    _
  // Predicated region
  $region10: #{_devis_forward.1} parent=0 // pred_check
    _
  $region11: #{_devis_forward.1} parent=0 // pred_check_branch
    %15 = sbr.rel (0) target = $region13
  $region12: #{_devis_forward.1} parent=0 // pred_region
    _
  $region13: #{_devis_forward.1} parent=0 // pred_fallthru
    _
  %v16 = vld [vmem:[%s1] sm:$0x3f]
  %v17 = vxor.u32 %v16, 2147483648
  %v18 = vmul.f32 %v17, 1.442695
  %v19 = vpow.pop %v18
  %v20 = vadd.f32 %v19, 1.0
  %v21 = vrcp.pop %v20
  %v22 = vmul.f32 1.0, %v21
  %vm23 = vcmask 1045504
  %v24 = vsel %vm23, %v22, 0.0
  %v25 = vrot.slane %v24, 4
  %v26 = vadd.f32 %v24, %v25
  %v27 = vrot.slane %v26, 2
  %v28 = vadd.f32 %v26, %v27
  %v29 = vrot.slane %v28, 1
  %v30 = vadd.f32 %v28, %v29
  %v31 = vmul.f32 %v30, 0.16666667
  %32 = vst [vmem:[%s3] sm:$0x1] %v31
  %v33 = vld [vmem:[%s2] sm:$0xff]
  %34 = vrot.lane.b32.xlu0 %v33, 126
  %v35 = vpop.permute.xlu0 %34
  %36 = vrot.lane.b32.xlu0 %v33, 2
  %v37 = vpop.permute.xlu0 %36
  %v38 = vlaneseq
  %v39 = vand.u32 %v38, 127
  %vm40 = vcmp.lt.s32.totalorder %v39, 0
  %v41 = vsub.s32 0, %v39
  %v42 = vsel %vm40, %v41, %v39
  %v43 = vshrl.u32 %v42, 2
  %v44 = vand.u32 %v42, 3
  %v45 = vsub.s32 0, %v44
  %v46 = vsel %vm40, %v45, %v44
  %vm47 = vcmp.ne.s32.totalorder %v46, 0
  %vm48 = vcmp.lt.s32.totalorder %v46, 0
  %vm49 = vmand %vm48, %vm47
  %v50 = vadd.s32 %v46, 4
  %v51 = vsel %vm49, %v50, %v46
  %vm52 = vcmp.lt.s32.totalorder %v51, 2
  %v53 = vmul.f32 %v35, 0.5
  %v54 = vsub.f32 %v33, %v53
  %v55 = vmul.f32 %v33, 0.5
  %v56 = vadd.f32 %v37, %v55
  %v57 = vsel %vm52, 1, 0
  %vm58 = vcmp.eq.s32.totalorder %v57, 1
  %v59 = vsel %vm58, %v54, %v56
  %v60 = vld [vmem:[%s0] sm:$0x1]
  %v62 = vlaneseq
  %v63 = vshrl.u32 %v62, 7
  %v64 = vsub.s32 0, %v63
  %v65 = vrot.slane %v60, %v64
  %v67 = vmul.f32 %v59, %v65
  %v68 = vmax.f32 %v67, 0.0
  %v69 = vmin.f32 %v65, %v68
  %70 = vst [vmem:[%s4] sm:$0x3f] %v69
  // Predicated region
  $region14: #{_devis_forward.1} parent=0 // pred_check
    _
  $region15: #{_devis_forward.1} parent=0 // pred_check_branch
    %72 = sbr.rel (0) target = $region17
  $region16: #{_devis_forward.1} parent=0 // pred_region
    _
  $region17: #{_devis_forward.1} parent=0 // pred_fallthru
    _
  // Predicated region
  $region18: #{_devis_forward.1} parent=0 // pred_check
    _
  $region19: #{_devis_forward.1} parent=0 // pred_check_branch
    %74 = sbr.rel (0) target = $region21
  $region20: #{_devis_forward.1} parent=0 // pred_region
    _
  $region21: #{_devis_forward.1} parent=0 // pred_fallthru
    _
  // Predicated region
  $region22: #{_devis_forward.1} parent=0 // pred_check
    _
  $region23: #{_devis_forward.1} parent=0 // pred_check_branch
    %76 = sbr.rel (0) target = $region25
  $region24: #{_devis_forward.1} parent=0 // pred_region
    _
  $region25: #{_devis_forward.1} parent=0 // pred_fallthru
    _
  // Predicated region
  $region26: #{_devis_forward.1} parent=0 // pred_check
    _
  $region27: #{_devis_forward.1} parent=0 // pred_check_branch
    %78 = sbr.rel (0) target = $region29
  $region28: #{_devis_forward.1} parent=0 // pred_region
    _
  $region29: #{_devis_forward.1} parent=0 // pred_fallthru
    _

</llo_original>
